<compile_context>
chip_gen: v7x
topology: tpu7x:2x2x1
jax: 0.10.0
libtpu: 0.0.40
codegen_flags: <defaults>
</compile_context>

<pallas_src>
import jax
import jax.numpy as jnp
from jax.experimental import pallas as pl
from jax.experimental.pallas import tpu as pltpu


def _round_up(x, m):
    return ((x + m - 1) // m) * m


def _cinnfc_kernel(scalars_ref, noise_ref, var_ref,
                   w0t_ref, b0_ref, w1t_ref, b1_ref, w2c_ref,
                   out_ref):
    strength = scalars_ref[0]            # SMEM scalar
    b2_0 = scalars_ref[1]                # SMEM scalar (last-layer bias, column 0)

    noise = noise_ref[...]               # (1, TN)
    x = var_ref[...]                     # (D, TN)
    w0t = w0t_ref[...]                   # (H, D)
    d, tn = x.shape
    h_dim = w0t.shape[0]

    # Layer 0: tanh(W0^T x + b0).  K = D is tiny -> VPU broadcast FMAs, not MXU.
    if d <= 8:
        acc = jnp.broadcast_to(b0_ref[...], (h_dim, tn))
        for k in range(d):
            acc = acc + w0t[:, k:k + 1] * x[k:k + 1, :]
    else:
        acc = jnp.dot(w0t, x, preferred_element_type=jnp.float32) + b0_ref[...]
    h = jnp.tanh(acc)                    # (H, TN)

    # Layer 1: H x H contraction -> MXU.
    h = jnp.tanh(jnp.dot(w1t_ref[...], h, preferred_element_type=jnp.float32)
                 + b1_ref[...])          # (H, TN)

    # Last layer: only output column 0 is consumed -> VPU mul + XLU sublane reduce.
    ev = jnp.sum(w2c_ref[...] * h, axis=0, keepdims=True) + b2_0   # (1, TN)

    nonlin = ev + noise                                            # (1, TN)
    base_sum = noise + jnp.sum(x, axis=0, keepdims=True)           # (1, TN)
    out_ref[...] = nonlin * strength + (1.0 - strength) * base_sum


def cinnfc_forward(noise, variables, params, strength, *, block_n=1024):
    """noise: (N,), variables: (N, D). Returns (N,) float32."""
    noise = jnp.asarray(noise, jnp.float32).reshape(-1)
    n = noise.shape[0]
    variables = jnp.asarray(variables, jnp.float32).reshape(n, -1)
    d = variables.shape[1]

    if d == 0:
        # dim_in == 0: nonlin = base_sum = noise, so out == noise exactly.
        return noise

    w0, b0, w1, b1, w2, b2 = params
    h_dim = w0.shape[1]

    # Lane-dense transposed layout: samples on the lane (last) axis.
    noise_t = noise.reshape(1, n)
    var_t = variables.T                                     # (D, N)
    w0t = jnp.asarray(w0, jnp.float32).T                    # (H, D)
    b0t = jnp.asarray(b0, jnp.float32).reshape(h_dim, 1)
    w1t = jnp.asarray(w1, jnp.float32).T                    # (H, H)
    b1t = jnp.asarray(b1, jnp.float32).reshape(h_dim, 1)
    w2c = jnp.asarray(w2, jnp.float32)[:, 0:1]              # (H, 1) column 0 only
    b2_0 = jnp.asarray(b2, jnp.float32).reshape(-1)[0]

    scalars = jnp.stack([jnp.asarray(strength, jnp.float32), b2_0])  # (2,) -> SMEM

    # Tile the sample axis; block_n lanes per grid step (multiple of 128).
    tn = min(block_n, _round_up(n, 128))
    n_pad = _round_up(n, tn)
    if n_pad != n:
        pad = n_pad - n
        noise_t = jnp.pad(noise_t, ((0, 0), (0, pad)))
        var_t = jnp.pad(var_t, ((0, 0), (0, pad)))

    out = pl.pallas_call(
        _cinnfc_kernel,
        out_shape=jax.ShapeDtypeStruct((1, n_pad), jnp.float32),
        grid=(pl.cdiv(n_pad, tn),),
        in_specs=[
            pl.BlockSpec(memory_space=pltpu.MemorySpace.SMEM),   # [strength, b2_0]
            pl.BlockSpec((1, tn), lambda i: (0, i)),             # noise   (streamed)
            pl.BlockSpec((d, tn), lambda i: (0, i)),             # vars    (streamed)
            pl.BlockSpec((h_dim, d), lambda i: (0, 0)),          # W0^T    (resident)
            pl.BlockSpec((h_dim, 1), lambda i: (0, 0)),          # b0      (resident)
            pl.BlockSpec((h_dim, h_dim), lambda i: (0, 0)),      # W1^T    (resident)
            pl.BlockSpec((h_dim, 1), lambda i: (0, 0)),          # b1      (resident)
            pl.BlockSpec((h_dim, 1), lambda i: (0, 0)),          # W2[:,0] (resident)
        ],
        out_specs=pl.BlockSpec((1, tn), lambda i: (0, i)),
        compiler_params=pltpu.CompilerParams(
            dimension_semantics=("parallel",)),
    )(scalars, noise_t, var_t, w0t, b0t, w1t, b1t, w2c)
    return out[0, :n]


def _reference(noise, variables, params, strength):
    w0, b0, w1, b1, w2, b2 = params
    x = variables
    h = jnp.tanh(x @ w0 + b0)
    h = jnp.tanh(h @ w1 + b1)
    y = h @ w2 + b2
    ev = y[:, 0:1]
    nonlin = ev + noise.reshape(-1, 1)
    base_sum = noise.reshape(-1, 1) + jnp.sum(x, axis=1, keepdims=True)
    return (nonlin * strength + (1.0 - strength) * base_sum).reshape(-1)


if __name__ == "__main__":
    key = jax.random.PRNGKey(0)
    D, H = 3, 32                  # dim_in = D + 1 = 4, nr_layers = 2, nr_blocks = 1
    strength = 0.7

    ks = jax.random.split(key, 8)
    w0 = 0.1 * jax.random.normal(ks[2], (D, H), jnp.float32)
    b0 = 0.05 * jax.random.normal(ks[5], (1, H), jnp.float32)
    w1 = 0.1 * jax.random.normal(ks[3], (H, H), jnp.float32)
    b1 = 0.05 * jax.random.normal(ks[6], (1, H), jnp.float32)
    w2 = 0.1 * jax.random.normal(ks[4], (H, D), jnp.float32)
    b2 = 0.05 * jax.random.normal(ks[7], (1, D), jnp.float32)
    params = (w0, b0, w1, b1, w2, b2)

    # Small case (single grid step, padded to 128 lanes).
    noise_s = jax.random.normal(ks[0], (8,), jnp.float32)
    var_s = jax.random.normal(ks[1], (8, D), jnp.float32)
    out_s = jax.block_until_ready(cinnfc_forward(noise_s, var_s, params, strength))
    ref_s = _reference(noise_s, var_s, params, strength)
    assert out_s.shape == (8,)
    assert jnp.allclose(out_s, ref_s, atol=1e-5, rtol=1e-5), (out_s, ref_s)

    # Larger, non-multiple-of-128 case exercising the multi-block grid path.
    noise_l = jax.random.normal(ks[0], (1000,), jnp.float32)
    var_l = jax.random.normal(ks[1], (1000, D), jnp.float32)
    out_l = jax.block_until_ready(
        cinnfc_forward(noise_l, var_l, params, strength, block_n=256))
    ref_l = _reference(noise_l, var_l, params, strength)
    assert out_l.shape == (1000,)
    assert jnp.allclose(out_l, ref_l, atol=1e-5, rtol=1e-5)

    print("KERNEL_OK")
</pallas_src>

<mosaic_0001>
module attributes {stable_mosaic.version = 11 : i64} {
  func.func @_cinnfc_kernel(%arg0: i32, %arg1: memref<2xf32, #tpu.memory_space<smem>>, %arg2: memref<1x128xf32, #tpu.memory_space<vmem>>, %arg3: memref<3x128xf32, #tpu.memory_space<vmem>>, %arg4: memref<32x3xf32, #tpu.memory_space<vmem>>, %arg5: memref<32x1xf32, #tpu.memory_space<vmem>>, %arg6: memref<32x32xf32, #tpu.memory_space<vmem>>, %arg7: memref<32x1xf32, #tpu.memory_space<vmem>>, %arg8: memref<32x1xf32, #tpu.memory_space<vmem>>, %arg9: memref<1x128xf32, #tpu.memory_space<vmem>>) attributes {dimension_semantics = [#tpu.dimension_semantics<parallel>], iteration_bounds = array<i64: 1>, scalar_prefetch = 0 : i64, scratch_operands = 0 : i64, tpu.core_type = #tpu.core_type<tc>, window_params = [{transform_indices = @transform_0, window_bounds = array<i64: 2>}, {transform_indices = @transform_1, window_bounds = array<i64: 1, 128>}, {transform_indices = @transform_2, window_bounds = array<i64: 3, 128>}, {pipeline_mode = #tpu.pipeline_mode<synchronous>, transform_indices = @transform_3, window_bounds = array<i64: 32, 3>}, {pipeline_mode = #tpu.pipeline_mode<synchronous>, transform_indices = @transform_4, window_bounds = array<i64: 32, 1>}, {pipeline_mode = #tpu.pipeline_mode<synchronous>, transform_indices = @transform_5, window_bounds = array<i64: 32, 32>}, {pipeline_mode = #tpu.pipeline_mode<synchronous>, transform_indices = @transform_6, window_bounds = array<i64: 32, 1>}, {pipeline_mode = #tpu.pipeline_mode<synchronous>, transform_indices = @transform_7, window_bounds = array<i64: 32, 1>}, {transform_indices = @transform_8, window_bounds = array<i64: 1, 128>}]} {
    %c0 = arith.constant 0 : index
    %0 = memref.load %arg1[%c0] : memref<2xf32, #tpu.memory_space<smem>>
    %c1 = arith.constant 1 : index
    %1 = memref.load %arg1[%c1] : memref<2xf32, #tpu.memory_space<smem>>
    %c0_0 = arith.constant 0 : index
    %c0_1 = arith.constant 0 : index
    %2 = vector.load %arg2[%c0_0, %c0_1] : memref<1x128xf32, #tpu.memory_space<vmem>>, vector<1x128xf32>
    %c0_2 = arith.constant 0 : index
    %c0_3 = arith.constant 0 : index
    %3 = vector.load %arg3[%c0_2, %c0_3] : memref<3x128xf32, #tpu.memory_space<vmem>>, vector<3x128xf32>
    %c0_4 = arith.constant 0 : index
    %c0_5 = arith.constant 0 : index
    %4 = vector.load %arg4[%c0_4, %c0_5] : memref<32x3xf32, #tpu.memory_space<vmem>>, vector<32x3xf32>
    %c0_6 = arith.constant 0 : index
    %c0_7 = arith.constant 0 : index
    %5 = vector.load %arg5[%c0_6, %c0_7] : memref<32x1xf32, #tpu.memory_space<vmem>>, vector<32x1xf32>
    %6 = vector.shape_cast %5 : vector<32x1xf32> to vector<32x1xf32>
    %7 = vector.broadcast %6 : vector<32x1xf32> to vector<32x128xf32>
    %8 = vector.extract_strided_slice %4 {offsets = [0, 0], sizes = [32, 1], strides = [1, 1]} : vector<32x3xf32> to vector<32x1xf32>
    %9 = vector.extract_strided_slice %3 {offsets = [0, 0], sizes = [1, 128], strides = [1, 1]} : vector<3x128xf32> to vector<1x128xf32>
    %10 = vector.broadcast %8 : vector<32x1xf32> to vector<32x128xf32>
    %11 = vector.broadcast %9 : vector<1x128xf32> to vector<32x128xf32>
    %12 = arith.mulf %10, %11 : vector<32x128xf32>
    %13 = arith.addf %7, %12 : vector<32x128xf32>
    %14 = vector.extract_strided_slice %4 {offsets = [0, 1], sizes = [32, 1], strides = [1, 1]} : vector<32x3xf32> to vector<32x1xf32>
    %15 = vector.extract_strided_slice %3 {offsets = [1, 0], sizes = [1, 128], strides = [1, 1]} : vector<3x128xf32> to vector<1x128xf32>
    %16 = vector.broadcast %14 : vector<32x1xf32> to vector<32x128xf32>
    %17 = vector.broadcast %15 : vector<1x128xf32> to vector<32x128xf32>
    %18 = arith.mulf %16, %17 : vector<32x128xf32>
    %19 = arith.addf %13, %18 : vector<32x128xf32>
    %20 = vector.extract_strided_slice %4 {offsets = [0, 2], sizes = [32, 1], strides = [1, 1]} : vector<32x3xf32> to vector<32x1xf32>
    %21 = vector.extract_strided_slice %3 {offsets = [2, 0], sizes = [1, 128], strides = [1, 1]} : vector<3x128xf32> to vector<1x128xf32>
    %22 = vector.broadcast %20 : vector<32x1xf32> to vector<32x128xf32>
    %23 = vector.broadcast %21 : vector<1x128xf32> to vector<32x128xf32>
    %24 = arith.mulf %22, %23 : vector<32x128xf32>
    %25 = arith.addf %19, %24 : vector<32x128xf32>
    %26 = math.tanh %25 : vector<32x128xf32>
    %c0_8 = arith.constant 0 : index
    %c0_9 = arith.constant 0 : index
    %27 = vector.load %arg6[%c0_8, %c0_9] : memref<32x32xf32, #tpu.memory_space<vmem>>, vector<32x32xf32>
    %cst = arith.constant dense<0.000000e+00> : vector<32x128xf32>
    %28 = tpu.matmul %27, %26, %cst {dimension_numbers = #tpu.dot_dimension_numbers<[1], [0], [0], [1], [0, 0, 1, 1], [], []>} : vector<32x32xf32>, vector<32x128xf32>, vector<32x128xf32> -> vector<32x128xf32>
    %c0_10 = arith.constant 0 : index
    %c0_11 = arith.constant 0 : index
    %29 = vector.load %arg7[%c0_10, %c0_11] : memref<32x1xf32, #tpu.memory_space<vmem>>, vector<32x1xf32>
    %30 = vector.broadcast %29 : vector<32x1xf32> to vector<32x128xf32>
    %31 = arith.addf %28, %30 : vector<32x128xf32>
    %32 = math.tanh %31 : vector<32x128xf32>
    %c0_12 = arith.constant 0 : index
    %c0_13 = arith.constant 0 : index
    %33 = vector.load %arg8[%c0_12, %c0_13] : memref<32x1xf32, #tpu.memory_space<vmem>>, vector<32x1xf32>
    %34 = vector.broadcast %33 : vector<32x1xf32> to vector<32x128xf32>
    %35 = arith.mulf %34, %32 : vector<32x128xf32>
    %cst_14 = arith.constant dense<0.000000e+00> : vector<128xf32>
    %36 = vector.multi_reduction <add>, %35, %cst_14 [0] : vector<32x128xf32> to vector<128xf32>
    %37 = vector.shape_cast %36 : vector<128xf32> to vector<1x128xf32>
    %38 = vector.broadcast %1 : f32 to vector<1x128xf32>
    %39 = arith.addf %37, %38 : vector<1x128xf32>
    %40 = arith.addf %39, %2 : vector<1x128xf32>
    %cst_15 = arith.constant dense<0.000000e+00> : vector<128xf32>
    %41 = vector.multi_reduction <add>, %3, %cst_15 [0] : vector<3x128xf32> to vector<128xf32>
    %42 = vector.shape_cast %41 : vector<128xf32> to vector<1x128xf32>
    %43 = arith.addf %2, %42 : vector<1x128xf32>
    %44 = vector.broadcast %0 : f32 to vector<1x128xf32>
    %45 = arith.mulf %40, %44 : vector<1x128xf32>
    %cst_16 = arith.constant 1.000000e+00 : f32
    %46 = arith.subf %cst_16, %0 : f32
    %47 = vector.broadcast %46 : f32 to vector<1x128xf32>
    %48 = arith.mulf %47, %43 : vector<1x128xf32>
    %49 = arith.addf %45, %48 : vector<1x128xf32>
    %c0_17 = arith.constant 0 : index
    %c0_18 = arith.constant 0 : index
    %50 = vector.load %arg9[%c0_17, %c0_18] : memref<1x128xf32, #tpu.memory_space<vmem>>, vector<1x128xf32>
    tpu.vector_store %arg9[%c0_17, %c0_18], %49 {strides = array<i32>} : memref<1x128xf32, #tpu.memory_space<vmem>>, vector<1x128xf32>,
    return
  }
  func.func @transform_0(%arg0: i32) -> i32 {
    %c0_i32 = arith.constant 0 : i32
    %c0_i32_0 = arith.constant 0 : i32
    return %c0_i32 : i32
  }
  func.func @transform_1(%arg0: i32) -> (i32, i32) {
    %c0_i32 = arith.constant 0 : i32
    %c0_i32_0 = arith.constant 0 : i32
    return %c0_i32, %arg0 : i32, i32
  }
  func.func @transform_2(%arg0: i32) -> (i32, i32) {
    %c0_i32 = arith.constant 0 : i32
    %c0_i32_0 = arith.constant 0 : i32
    return %c0_i32, %arg0 : i32, i32
  }
  func.func @transform_3(%arg0: i32) -> (i32, i32) {
    %c0_i32 = arith.constant 0 : i32
    %c0_i32_0 = arith.constant 0 : i32
    %c0_i32_1 = arith.constant 0 : i32
    return %c0_i32, %c0_i32_0 : i32, i32
  }
  func.func @transform_4(%arg0: i32) -> (i32, i32) {
    %c0_i32 = arith.constant 0 : i32
    %c0_i32_0 = arith.constant 0 : i32
    %c0_i32_1 = arith.constant 0 : i32
    return %c0_i32, %c0_i32_0 : i32, i32
  }
  func.func @transform_5(%arg0: i32) -> (i32, i32) {
    %c0_i32 = arith.constant 0 : i32
    %c0_i32_0 = arith.constant 0 : i32
    %c0_i32_1 = arith.constant 0 : i32
    return %c0_i32, %c0_i32_0 : i32, i32
  }
  func.func @transform_6(%arg0: i32) -> (i32, i32) {
    %c0_i32 = arith.constant 0 : i32
    %c0_i32_0 = arith.constant 0 : i32
    %c0_i32_1 = arith.constant 0 : i32
    return %c0_i32, %c0_i32_0 : i32, i32
  }
  func.func @transform_7(%arg0: i32) -> (i32, i32) {
    %c0_i32 = arith.constant 0 : i32
    %c0_i32_0 = arith.constant 0 : i32
    %c0_i32_1 = arith.constant 0 : i32
    return %c0_i32, %c0_i32_0 : i32, i32
  }
  func.func @transform_8(%arg0: i32) -> (i32, i32) {
    %c0_i32 = arith.constant 0 : i32
    %c0_i32_0 = arith.constant 0 : i32
    return %c0_i32, %arg0 : i32, i32
  }
}

</mosaic_0001>

<llo_original>
// kernel: tpu_custom_call.1
$region0: #{tpu_custom_call.1}
  #allocation0 [shape = 'u32[]', space=smem, size = 0x4, offset = 0x4, fixed_abs, tag = 'smem constant byte address 0x4 - core index']
  #allocation1 [shape = 'u32[144,128]{1,0:T(1,128)}', space=vmem, size = 0x12000, scoped, tag = 'internal scratch']
  %s0 = inlined_call_operand.vmem [shape: f32[2], index: 0, kind: input, shape index: {}]
  %s1 = inlined_call_operand.vmem [shape: f32[1,128], index: 1, kind: input, shape index: {}]
  %s2 = inlined_call_operand.vmem [shape: f32[3,128], index: 2, kind: input, shape index: {}]
  %s3 = inlined_call_operand.vmem [shape: f32[32,3], index: 3, kind: input, shape index: {}]
  %s4 = inlined_call_operand.vmem [shape: f32[32,1], index: 4, kind: input, shape index: {}]
  %s5 = inlined_call_operand.vmem [shape: f32[32,32], index: 5, kind: input, shape index: {}]
  %s6 = inlined_call_operand.vmem [shape: f32[32,1], index: 6, kind: input, shape index: {}]
  %s7 = inlined_call_operand.vmem [shape: f32[32,1], index: 7, kind: input, shape index: {}]
  %s8 = inlined_call_operand.hbm [shape: f32[1,128], index: 8, kind: output, shape index: {}]
  %s9 = sld [smem:[#allocation0]]
  $region46: #{tpu_custom_call.1} parent=0
    _
  %s11 = ssub.s32 1, %s9
  %s12 = scalar_select 0, %s11, %s9
  $region1: #{tpu_custom_call.1} parent=0
    #allocation2 [shape = 'u8[512]{0}', space=smem, size = 0x200, scoped, tag = 'input window, operand 0, single buffered']
    #allocation3 [shape = 's32[1]{0}', space=sflag, size = 0x4, scoped, tag = 'scoped memory for tpu_custom_call.1']
    #allocation4 [shape = 's32[1]{0}', space=sflag, size = 0x4, scoped, tag = 'scoped memory for tpu_custom_call.1']
    #allocation5 [shape = 'u8[512]{0}', space=vmem, size = 0x400, scoped, tag = 'output window, operand 0, single buffered']
    %13 = vsyncpa [#allocation4], 0
    %14 = vsyncpa [#allocation3], 0
    // Predicated region
    $region2: #{tpu_custom_call.1} parent=1 // pred_check
      _
    $region3: #{tpu_custom_call.1} parent=1 // pred_check_branch
      %16 = sbr.rel (0) target = $region5
    $region4: #{tpu_custom_call.1} parent=1 // pred_region
      %s18 = ssub.s32 16, 16
      %19 = vsyncadd [#allocation4], %s18
      %s21 = sshll.u32 %s0, 4
      %s22 = int_to_ptr.vmem [resolvable:$true] %s21
      %24 = dma.vmem_to_smem %s22, 16, [#allocation2], [#allocation4]
    $region5: #{tpu_custom_call.1} parent=1 // pred_fallthru
      _
    // Predicated region
    $region6: #{tpu_custom_call.1} parent=1 // pred_check
      _
    $region7: #{tpu_custom_call.1} parent=1 // pred_check_branch
      %26 = sbr.rel (0) target = $region9
    $region8: #{tpu_custom_call.1} parent=1 // pred_region
      _
    $region9: #{tpu_custom_call.1} parent=1 // pred_fallthru
      _
    // Predicated region
    $region10: #{tpu_custom_call.1} parent=1 // pred_check
      _
    $region11: #{tpu_custom_call.1} parent=1 // pred_check_branch
      %28 = sbr.rel (0) target = $region13
    $region12: #{tpu_custom_call.1} parent=1 // pred_region
      _
    $region13: #{tpu_custom_call.1} parent=1 // pred_fallthru
      _
    // Predicated region
    $region14: #{tpu_custom_call.1} parent=1 // pred_check
      _
    $region15: #{tpu_custom_call.1} parent=1 // pred_check_branch
      %30 = sbr.rel (0) target = $region17
    $region16: #{tpu_custom_call.1} parent=1 // pred_region
      _
    $region17: #{tpu_custom_call.1} parent=1 // pred_fallthru
      _
    // Predicated region
    $region18: #{tpu_custom_call.1} parent=1 // pred_check
      _
    $region19: #{tpu_custom_call.1} parent=1 // pred_check_branch
      %32 = sbr.rel (0) target = $region21
    $region20: #{tpu_custom_call.1} parent=1 // pred_region
      _
    $region21: #{tpu_custom_call.1} parent=1 // pred_fallthru
      _
    // Predicated region
    $region22: #{tpu_custom_call.1} parent=1 // pred_check
      _
    $region23: #{tpu_custom_call.1} parent=1 // pred_check_branch
      %34 = sbr.rel (0) target = $region25
    $region24: #{tpu_custom_call.1} parent=1 // pred_region
      _
    $region25: #{tpu_custom_call.1} parent=1 // pred_fallthru
      _
    // Predicated region
    $region26: #{tpu_custom_call.1} parent=1 // pred_check
      _
    $region27: #{tpu_custom_call.1} parent=1 // pred_check_branch
      %36 = sbr.rel (0) target = $region29
    $region28: #{tpu_custom_call.1} parent=1 // pred_region
      _
    $region29: #{tpu_custom_call.1} parent=1 // pred_fallthru
      _
    // Predicated region
    $region30: #{tpu_custom_call.1} parent=1 // pred_check
      _
    $region31: #{tpu_custom_call.1} parent=1 // pred_check_branch
      %38 = sbr.rel (0) target = $region33
    $region32: #{tpu_custom_call.1} parent=1 // pred_region
      _
    $region33: #{tpu_custom_call.1} parent=1 // pred_fallthru
      _
    // Predicated region
    $region34: #{tpu_custom_call.1} parent=1 // pred_check
      _
    $region35: #{tpu_custom_call.1} parent=1 // pred_check_branch
      %40 = sbr.rel (0) target = $region37
    $region36: #{tpu_custom_call.1} parent=1 // pred_region
      %41 = dma.done [#allocation4], 16
    $region37: #{tpu_custom_call.1} parent=1 // pred_fallthru
      _
    %42 = sfence
    %s43 = sld [smem:[#allocation2]]
    %s44 = sld [smem:[#allocation2 + $0x1]]
    %v45 = vld [vmem:[%s1] sm:$0x1]
    %v46 = vld [vmem:[%s2] sm:$0x7]
    %v47 = vld [vmem:[%s3] sm:$0xff]
    %v48 = vld [vmem:[%s3 + $0x8] sm:$0xff]
    %v49 = vld [vmem:[%s3 + $0x10] sm:$0xff]
    %v50 = vld [vmem:[%s3 + $0x18] sm:$0xff]
    %v51 = vld [vmem:[%s4] sm:$0xff]
    %v52 = vld [vmem:[%s4 + $0x8] sm:$0xff]
    %v53 = vld [vmem:[%s4 + $0x10] sm:$0xff]
    %v54 = vld [vmem:[%s4 + $0x18] sm:$0xff]
    %56 = vset.pattern.permute.xlu0 0
    %57 = vperm.xlu0 %56, %v51
    %v58 = vpop.permute.xlu0 %57
    %61 = vset.pattern.permute.xlu0 0
    %62 = vperm.xlu0 %61, %v52
    %v63 = vpop.permute.xlu0 %62
    %66 = vset.pattern.permute.xlu0 0
    %67 = vperm.xlu0 %66, %v53
    %v68 = vpop.permute.xlu0 %67
    %71 = vset.pattern.permute.xlu0 0
    %72 = vperm.xlu0 %71, %v54
    %v73 = vpop.permute.xlu0 %72
    %76 = vset.pattern.permute.xlu0 0
    %77 = vperm.xlu0 %76, %v47
    %v78 = vpop.permute.xlu0 %77
    %81 = vset.pattern.permute.xlu0 0
    %82 = vperm.xlu0 %81, %v48
    %v83 = vpop.permute.xlu0 %82
    %86 = vset.pattern.permute.xlu0 0
    %87 = vperm.xlu0 %86, %v49
    %v88 = vpop.permute.xlu0 %87
    %91 = vset.pattern.permute.xlu0 0
    %92 = vperm.xlu0 %91, %v50
    %v93 = vpop.permute.xlu0 %92
    %v95 = vlaneseq
    %v96 = vshrl.u32 %v95, 7
    %v97 = vsub.s32 0, %v96
    %v98 = vrot.slane %v46, %v97
    %v99 = vmul.f32 %v78, %v98
    %v100 = vmul.f32 %v83, %v98
    %v101 = vmul.f32 %v88, %v98
    %v102 = vmul.f32 %v93, %v98
    %v103 = vadd.f32 %v58, %v99
    %v104 = vadd.f32 %v63, %v100
    %v105 = vadd.f32 %v68, %v101
    %v106 = vadd.f32 %v73, %v102
    %107 = vset.pattern.permute.xlu0 1
    %108 = vperm.xlu0 %107, %v47
    %v109 = vpop.permute.xlu0 %108
    %111 = vset.pattern.permute.xlu0 1
    %112 = vperm.xlu0 %111, %v48
    %v113 = vpop.permute.xlu0 %112
    %115 = vset.pattern.permute.xlu0 1
    %116 = vperm.xlu0 %115, %v49
    %v117 = vpop.permute.xlu0 %116
    %119 = vset.pattern.permute.xlu0 1
    %120 = vperm.xlu0 %119, %v50
    %v121 = vpop.permute.xlu0 %120
    %v123 = vlaneseq
    %v124 = vshrl.u32 %v123, 7
    %v125 = vsub.s32 1, %v124
    %v126 = vrot.slane %v46, %v125
    %v127 = vmul.f32 %v109, %v126
    %v128 = vmul.f32 %v113, %v126
    %v129 = vmul.f32 %v117, %v126
    %v130 = vmul.f32 %v121, %v126
    %v131 = vadd.f32 %v103, %v127
    %v132 = vadd.f32 %v104, %v128
    %v133 = vadd.f32 %v105, %v129
    %v134 = vadd.f32 %v106, %v130
    %135 = vset.pattern.permute.xlu0 2
    %136 = vperm.xlu0 %135, %v47
    %v137 = vpop.permute.xlu0 %136
    %139 = vset.pattern.permute.xlu0 2
    %140 = vperm.xlu0 %139, %v48
    %v141 = vpop.permute.xlu0 %140
    %143 = vset.pattern.permute.xlu0 2
    %144 = vperm.xlu0 %143, %v49
    %v145 = vpop.permute.xlu0 %144
    %147 = vset.pattern.permute.xlu0 2
    %148 = vperm.xlu0 %147, %v50
    %v149 = vpop.permute.xlu0 %148
    %v151 = vlaneseq
    %v152 = vshrl.u32 %v151, 7
    %v153 = vsub.s32 2, %v152
    %v154 = vrot.slane %v46, %v153
    %v155 = vmul.f32 %v137, %v154
    %v156 = vmul.f32 %v141, %v154
    %v157 = vmul.f32 %v145, %v154
    %v158 = vmul.f32 %v149, %v154
    %v159 = vadd.f32 %v131, %v155
    %v160 = vadd.f32 %v132, %v156
    %v161 = vadd.f32 %v133, %v157
    %v162 = vadd.f32 %v134, %v158
    %v163 = vtanh.pop %v159
    %v164 = vtanh.pop %v160
    %v165 = vtanh.pop %v161
    %v166 = vtanh.pop %v162
    %v167 = vld [vmem:[%s5] sm:$0xff]
    %v168 = vld [vmem:[%s5 + $0x8] sm:$0xff]
    %v169 = vld [vmem:[%s5 + $0x10] sm:$0xff]
    %v170 = vld [vmem:[%s5 + $0x18] sm:$0xff]
    %v171 = vld [vmem:[%s6] sm:$0xff]
    %v172 = vld [vmem:[%s6 + $0x8] sm:$0xff]
    %v173 = vld [vmem:[%s6 + $0x10] sm:$0xff]
    %v174 = vld [vmem:[%s6 + $0x18] sm:$0xff]
    %176 = vset.pattern.permute.xlu0 0
    %177 = vperm.xlu0 %176, %v171
    %v178 = vpop.permute.xlu0 %177
    %181 = vset.pattern.permute.xlu0 0
    %182 = vperm.xlu0 %181, %v172
    %v183 = vpop.permute.xlu0 %182
    %186 = vset.pattern.permute.xlu0 0
    %187 = vperm.xlu0 %186, %v173
    %v188 = vpop.permute.xlu0 %187
    %191 = vset.pattern.permute.xlu0 0
    %192 = vperm.xlu0 %191, %v174
    %v193 = vpop.permute.xlu0 %192
    %vm195 = vcmask 261120
    %v197 = vsel %vm195, %v167, 0
    %v200 = vsel %vm195, %v168, 0
    %v203 = vsel %vm195, %v169, 0
    %v206 = vsel %vm195, %v170, 0
    %208 = vmatprep.subr.mxu0 0.0
    %209 = vmatpush1.msra.mxu0 %v163
    %210 = vmatprep.subr.mxu0 0.0
    %211 = vmatpush1.msra.mxu0 %v164
    %212 = vmatprep.subr.mxu0 0.0
    %213 = vmatpush1.msra.mxu0 %v165
    %214 = vmatprep.subr.mxu0 0.0
    %215 = vmatpush1.msra.mxu0 %v166
    %216 = vmatprep.subr.mxu0 0.0
    %217 = vmatpush1.msra.mxu0 0.0
    %218 = vmatprep.subr.mxu0 0.0
    %219 = vmatpush1.msra.mxu0 0.0
    %220 = vmatprep.subr.mxu0 0.0
    %221 = vmatpush1.msra.mxu0 0.0
    %222 = vmatprep.subr.mxu0 0.0
    %223 = vmatpush1.msra.mxu0 0.0
    %224 = vmatprep.subr.mxu0 0.0
    %225 = vmatpush1.msra.mxu0 0.0
    %226 = vmatprep.subr.mxu0 0.0
    %227 = vmatpush1.msra.mxu0 0.0
    %228 = vmatprep.subr.mxu0 0.0
    %229 = vmatpush1.msra.mxu0 0.0
    %230 = vmatprep.subr.mxu0 0.0
    %231 = vmatpush1.msra.mxu0 0.0
    %232 = vmatprep.subr.mxu0 0.0
    %233 = vmatpush1.msra.mxu0 0.0
    %234 = vmatprep.subr.mxu0 0.0
    %235 = vmatpush1.msra.mxu0 0.0
    %236 = vmatprep.subr.mxu0 0.0
    %237 = vmatpush1.msra.mxu0 0.0
    %238 = vmatprep.subr.mxu0 0.0
    %239 = vmatpush1.msra.mxu0 0.0
    %240 = vmatprep.subr.mxu0 0.0
    %241 = vmatpush1.msra.mxu0 0.0
    %242 = vmatprep.subr.mxu0 0.0
    %243 = vmatpush1.msra.mxu0 0.0
    %244 = vmatprep.subr.mxu0 0.0
    %245 = vmatpush1.msra.mxu0 0.0
    %246 = vmatprep.subr.mxu0 0.0
    %247 = vmatpush1.msra.mxu0 0.0
    %248 = vmatprep.subr.mxu0 0.0
    %249 = vmatpush1.msra.mxu0 0.0
    %250 = vmatprep.subr.mxu0 0.0
    %251 = vmatpush1.msra.mxu0 0.0
    %252 = vmatprep.subr.mxu0 0.0
    %253 = vmatpush1.msra.mxu0 0.0
    %254 = vmatprep.subr.mxu0 0.0
    %255 = vmatpush1.msra.mxu0 0.0
    %256 = vmatprep.subr.mxu0 0.0
    %257 = vmatpush1.msra.mxu0 0.0
    %258 = vmatprep.subr.mxu0 0.0
    %259 = vmatpush1.msra.mxu0 0.0
    %260 = vmatprep.subr.mxu0 0.0
    %261 = vmatpush1.msra.mxu0 0.0
    %262 = vmatprep.subr.mxu0 0.0
    %263 = vmatpush1.msra.mxu0 0.0
    %264 = vmatprep.subr.mxu0 0.0
    %265 = vmatpush1.msra.mxu0 0.0
    %266 = vmatprep.subr.mxu0 0.0
    %267 = vmatpush1.msra.mxu0 0.0
    %268 = vmatprep.subr.mxu0 0.0
    %269 = vmatpush1.msra.mxu0 0.0
    %270 = vmatprep.subr.mxu0 0.0
    %271 = vmatpush1.msra.mxu0 0.0
    %272 = vmatprep.mubr.f32.mxu0 0.0
    %273 = vmatmul.mubr.f32.gmra.mrb[0].mxu0 %v197
    %v274 = vpop.f32.mrb[0].mxu0
    %v275 = vadd.f32 %v178, %v274
    %v276 = vpop.f32.mrb[0].mxu0
    %277 = vmatprep.mubr.f32.mxu0 0.0
    %278 = vmatmul.mubr.f32.gmra.mrb[0].mxu0 %v200
    %v279 = vpop.f32.mrb[0].mxu0
    %v280 = vadd.f32 %v183, %v279
    %v281 = vpop.f32.mrb[0].mxu0
    %282 = vmatprep.mubr.f32.mxu0 0.0
    %283 = vmatmul.mubr.f32.gmra.mrb[0].mxu0 %v203
    %v284 = vpop.f32.mrb[0].mxu0
    %v285 = vadd.f32 %v188, %v284
    %v286 = vpop.f32.mrb[0].mxu0
    %287 = vmatprep.mubr.f32.mxu0 0.0
    %288 = vmatmul.mubr.f32.gmra.mrb[0].mxu0 %v206
    %v289 = vpop.f32.mrb[0].mxu0
    %v290 = vadd.f32 %v193, %v289
    %v291 = vpop.f32.mrb[0].mxu0
    %292 = vdwg.mxu0
    %v293 = vtanh.pop %v275
    %v294 = vtanh.pop %v280
    %v295 = vtanh.pop %v285
    %v296 = vtanh.pop %v290
    %v297 = vld [vmem:[%s7] sm:$0xff]
    %v298 = vld [vmem:[%s7 + $0x8] sm:$0xff]
    %v299 = vld [vmem:[%s7 + $0x10] sm:$0xff]
    %v300 = vld [vmem:[%s7 + $0x18] sm:$0xff]
    %302 = vset.pattern.permute.xlu0 0
    %303 = vperm.xlu0 %302, %v297
    %v304 = vpop.permute.xlu0 %303
    %307 = vset.pattern.permute.xlu0 0
    %308 = vperm.xlu0 %307, %v298
    %v309 = vpop.permute.xlu0 %308
    %312 = vset.pattern.permute.xlu0 0
    %313 = vperm.xlu0 %312, %v299
    %v314 = vpop.permute.xlu0 %313
    %317 = vset.pattern.permute.xlu0 0
    %318 = vperm.xlu0 %317, %v300
    %v319 = vpop.permute.xlu0 %318
    %v321 = vmul.f32 %v304, %v293
    %v322 = vmul.f32 %v309, %v294
    %v323 = vmul.f32 %v314, %v295
    %v324 = vmul.f32 %v319, %v296
    %v325 = vadd.f32 %v321, %v322
    %v326 = vadd.f32 %v325, %v323
    %v327 = vadd.f32 %v326, %v324
    %v328 = vrot.slane %v327, 4
    %v329 = vadd.f32 %v327, %v328
    %v330 = vrot.slane %v329, 2
    %v331 = vadd.f32 %v329, %v330
    %v332 = vrot.slane %v331, 1
    %v333 = vadd.f32 %v331, %v332
    %v334 = vstv %s44
    %v335 = vadd.f32 %v333, %v334
    %v336 = vadd.f32 %v335, %v45
    %vm337 = vcmask 1042432
    %v338 = vsel %vm337, %v46, 0.0
    %v339 = vrot.slane %v338, 4
    %v340 = vadd.f32 %v338, %v339
    %v341 = vrot.slane %v340, 2
    %v342 = vadd.f32 %v340, %v341
    %v343 = vrot.slane %v342, 1
    %v344 = vadd.f32 %v342, %v343
    %v345 = vadd.f32 %v45, %v344
    %v346 = vstv %s43
    %v347 = vmul.f32 %v336, %v346
    %s348 = ssub.f32 1.0, %s43
    %v349 = vstv %s348
    %v350 = vmul.f32 %v349, %v345
    %v351 = vadd.f32 %v347, %v350
    %352 = vst [vmem:[#allocation5] sm:$0x1] %v351
    // Predicated region
    $region38: #{tpu_custom_call.1} parent=1 // pred_check
      _
    $region39: #{tpu_custom_call.1} parent=1 // pred_check_branch
      %354 = sbr.rel (0) target = $region41
    $region40: #{tpu_custom_call.1} parent=1 // pred_region
      %s356 = ssub.s32 16, 16
      %357 = vsyncadd [#allocation3], %s356
      %s359 = sshll.u32 [#allocation5], 4
      %s360 = int_to_ptr.vmem [resolvable:$true] %s359
      %362 = dma.vmem_to_hbm [thread:$0]  %s360, 16, %s8, [#allocation3]
    $region41: #{tpu_custom_call.1} parent=1 // pred_fallthru
      _
    // Predicated region
    $region42: #{tpu_custom_call.1} parent=1 // pred_check
      _
    $region43: #{tpu_custom_call.1} parent=1 // pred_check_branch
      %364 = sbr.rel (0) target = $region45
    $region44: #{tpu_custom_call.1} parent=1 // pred_region
      %365 = dma.done [#allocation3], 16
    $region45: #{tpu_custom_call.1} parent=1 // pred_fallthru
      _
    %366 = vsyncpa [#allocation3], 1
    %367 = vsyncpa [#allocation4], 1

</llo_original>
